<compile_context>
chip_gen: v7x
topology: tpu7x:2x2x1
jax: 0.10.0
libtpu: 0.0.40
codegen_flags: <defaults>
</compile_context>

<pallas_src>
import jax
import jax.numpy as jnp
from jax.experimental import pallas as pl
from jax.experimental.pallas import tpu as pltpu


def _round_up(x, m):
    return (x + m - 1) // m * m


def _bert_intermediate_kernel(x_ref, w_ref, b_ref, alpha_ref, o_ref):
    # x_ref:     (TM, H)      input dtype (cast to bf16 here, on the VPU)
    # w_ref:     (H, I_pad)   bf16, VMEM-resident (constant index_map)
    # b_ref:     (1, I_pad)   f32
    # alpha_ref: (1, 1)       f32 in SMEM (shared PReLU parameter)
    # o_ref:     (TM, I_pad)
    x = x_ref[...].astype(jnp.bfloat16)
    y = jnp.dot(x, w_ref[...], preferred_element_type=jnp.float32)  # MXU, f32 acc
    y = y + b_ref[...]                                              # bias broadcast (f32 VPU)
    alpha = alpha_ref[0, 0]
    o_ref[...] = jnp.where(y >= 0, y, alpha * y).astype(o_ref.dtype)


def bert_intermediate_lc(hidden_states, weight, bias, alpha, *,
                         tile_m=512, out_dtype=None):
    """hidden_states: (B, S, H); weight: (I, H) [torch Linear layout];
       bias: (I,); alpha: scalar PReLU parameter (num_parameters=1).

       out_dtype: override the output dtype (e.g. jnp.bfloat16 to halve the
       dominant HBM writeback when the consumer re-casts anyway). Defaults to
       the input dtype (matches the torch module)."""
    B, S, H = hidden_states.shape
    I = weight.shape[0]
    M = B * S
    x_dtype = hidden_states.dtype
    out_dtype = x_dtype if out_dtype is None else out_dtype
    x_itemsize = jnp.dtype(x_dtype).itemsize
    out_itemsize = jnp.dtype(out_dtype).itemsize

    # M tiling: clamp to the problem, keep sublane-friendly multiples of 8.
    tile_m = min(tile_m, _round_up(M, 8))
    M_pad = _round_up(M, tile_m)
    # Lane-dense, 128-aligned intermediate dim.
    I_pad = _round_up(I, 128)

    x2d = hidden_states.reshape(M, H)
    if M_pad != M:
        x2d = jnp.pad(x2d, ((0, M_pad - M), (0, 0)))

    # One-time (folds under jit): weight -> (H, I_pad) bf16, bias -> (1, I_pad) f32.
    w_t = weight.T.astype(jnp.bfloat16)
    b = bias
    if I_pad != I:
        w_t = jnp.pad(w_t, ((0, 0), (0, I_pad - I)))
        b = jnp.pad(b, (0, I_pad - I))
    b2d = b.reshape(1, I_pad).astype(jnp.float32)
    a2d = jnp.asarray(alpha, jnp.float32).reshape(1, 1)

    grid = (M_pad // tile_m,)

    # Weight + bias are read once; x once; out written once.
    bytes_accessed = (M_pad * H * x_itemsize
                      + H * I_pad * 2
                      + I_pad * 4
                      + M_pad * I_pad * out_itemsize)

    # VMEM budget: resident weight + double-buffered x / out tiles + bias + slack.
    vmem_bytes = (H * I_pad * 2
                  + 2 * tile_m * H * x_itemsize
                  + 2 * tile_m * I_pad * out_itemsize
                  + I_pad * 4
                  + (2 << 20))
    vmem_limit = int(min(max(vmem_bytes, 16 << 20), 56 << 20))  # stay under v7x 64 MiB

    out = pl.pallas_call(
        _bert_intermediate_kernel,
        out_shape=jax.ShapeDtypeStruct((M_pad, I_pad), out_dtype),
        grid_spec=pltpu.PrefetchScalarGridSpec(
            num_scalar_prefetch=0,
            grid=grid,
            in_specs=[
                pl.BlockSpec((tile_m, H), lambda i: (i, 0)),        # x row tile (streamed)
                pl.BlockSpec((H, I_pad), lambda i: (0, 0)),         # weight: VMEM-resident
                pl.BlockSpec((1, I_pad), lambda i: (0, 0)),         # bias: VMEM-resident
                pl.BlockSpec(memory_space=pltpu.MemorySpace.SMEM),  # PReLU alpha scalar
            ],
            out_specs=pl.BlockSpec((tile_m, I_pad), lambda i: (i, 0)),
        ),
        compiler_params=pltpu.CompilerParams(
            dimension_semantics=("parallel",),   # megacore splits M on v7x
            vmem_limit_bytes=vmem_limit),
        cost_estimate=pl.CostEstimate(
            flops=2 * M_pad * H * I_pad,
            transcendentals=0,
            bytes_accessed=bytes_accessed),
    )(x2d, w_t, b2d, a2d)

    return out[:M, :I].reshape(B, S, I)


if __name__ == "__main__":
    # Small config consistent with the module: hidden=32, intermediate=128
    batch, seq, hidden, intermediate = 2, 8, 32, 128

    key = jax.random.PRNGKey(0)
    kx, kw, kb = jax.random.split(key, 3)

    hidden_states = jax.random.normal(kx, (batch, seq, hidden), jnp.float32)
    # Deterministic synthetic parameters (torch Linear shapes: W (I, H), b (I,))
    bound = 1.0 / (hidden ** 0.5)
    weight = jax.random.uniform(kw, (intermediate, hidden), jnp.float32,
                                minval=-bound, maxval=bound)
    bias = jax.random.uniform(kb, (intermediate,), jnp.float32,
                              minval=-bound, maxval=bound)
    alpha = jnp.float32(0.01)           # nn.PReLU(num_parameters=1, init=0.01)

    out = bert_intermediate_lc(hidden_states, weight, bias, alpha)
    jax.block_until_ready(out)

    # Reference in plain JAX, applying the same bf16 rounding on matmul inputs.
    xb = hidden_states.astype(jnp.bfloat16).astype(jnp.float32)
    wb = weight.astype(jnp.bfloat16).astype(jnp.float32)
    ref = xb @ wb.T + bias
    ref = jnp.where(ref >= 0, ref, alpha * ref)

    assert out.shape == (batch, seq, intermediate)
    assert jnp.allclose(out, ref, atol=1e-3, rtol=1e-3), \
        float(jnp.max(jnp.abs(out - ref)))

    print("KERNEL_OK")
</pallas_src>

<mosaic_0001>
module attributes {stable_mosaic.version = 11 : i64} {
  func.func @_bert_intermediate_kernel(%arg0: i32, %arg1: memref<16x32xf32, #tpu.memory_space<vmem>>, %arg2: memref<32x128xbf16, #tpu.memory_space<vmem>>, %arg3: memref<1x128xf32, #tpu.memory_space<vmem>>, %arg4: memref<1x1xf32, #tpu.memory_space<smem>>, %arg5: memref<16x128xf32, #tpu.memory_space<vmem>>) attributes {dimension_semantics = [#tpu.dimension_semantics<parallel>], iteration_bounds = array<i64: 1>, scalar_prefetch = 0 : i64, scratch_operands = 0 : i64, tpu.core_type = #tpu.core_type<tc>, window_params = [{transform_indices = @transform_0, window_bounds = array<i64: 16, 32>}, {pipeline_mode = #tpu.pipeline_mode<synchronous>, transform_indices = @transform_1, window_bounds = array<i64: 32, 128>}, {pipeline_mode = #tpu.pipeline_mode<synchronous>, transform_indices = @transform_2, window_bounds = array<i64: 1, 128>}, {transform_indices = @transform_3, window_bounds = array<i64: 1, 1>}, {transform_indices = @transform_4, window_bounds = array<i64: 16, 128>}]} {
    %c0 = arith.constant 0 : index
    %c0_0 = arith.constant 0 : index
    %0 = vector.load %arg1[%c0, %c0_0] : memref<16x32xf32, #tpu.memory_space<vmem>>, vector<16x32xf32>
    %1 = arith.truncf %0 : vector<16x32xf32> to vector<16x32xbf16>
    %c0_1 = arith.constant 0 : index
    %c0_2 = arith.constant 0 : index
    %2 = vector.load %arg2[%c0_1, %c0_2] : memref<32x128xbf16, #tpu.memory_space<vmem>>, vector<32x128xbf16>
    %cst = arith.constant dense<0.000000e+00> : vector<16x128xf32>
    %3 = tpu.matmul %1, %2, %cst {dimension_numbers = #tpu.dot_dimension_numbers<[1], [0], [0], [1], [0, 0, 1, 1], [], []>} : vector<16x32xbf16>, vector<32x128xbf16>, vector<16x128xf32> -> vector<16x128xf32>
    %c0_3 = arith.constant 0 : index
    %c0_4 = arith.constant 0 : index
    %4 = vector.load %arg3[%c0_3, %c0_4] : memref<1x128xf32, #tpu.memory_space<vmem>>, vector<1x128xf32>
    %5 = vector.broadcast %4 : vector<1x128xf32> to vector<16x128xf32>
    %6 = arith.addf %3, %5 : vector<16x128xf32>
    %c0_5 = arith.constant 0 : index
    %c0_6 = arith.constant 0 : index
    %7 = memref.load %arg4[%c0_5, %c0_6] : memref<1x1xf32, #tpu.memory_space<smem>>
    %cst_7 = arith.constant 0.000000e+00 : f32
    %8 = vector.broadcast %cst_7 : f32 to vector<16x128xf32>
    %9 = arith.cmpf oge, %6, %8 : vector<16x128xf32>
    %10 = vector.broadcast %7 : f32 to vector<16x128xf32>
    %11 = arith.mulf %10, %6 : vector<16x128xf32>
    %12 = arith.select %9, %6, %11 : vector<16x128xi1>, vector<16x128xf32>
    %c0_8 = arith.constant 0 : index
    %c0_9 = arith.constant 0 : index
    %13 = vector.load %arg5[%c0_8, %c0_9] : memref<16x128xf32, #tpu.memory_space<vmem>>, vector<16x128xf32>
    tpu.vector_store %arg5[%c0_8, %c0_9], %12 {strides = array<i32>} : memref<16x128xf32, #tpu.memory_space<vmem>>, vector<16x128xf32>,
    return
  }
  func.func @transform_0(%arg0: i32) -> (i32, i32) {
    %c0_i32 = arith.constant 0 : i32
    %c0_i32_0 = arith.constant 0 : i32
    return %arg0, %c0_i32 : i32, i32
  }
  func.func @transform_1(%arg0: i32) -> (i32, i32) {
    %c0_i32 = arith.constant 0 : i32
    %c0_i32_0 = arith.constant 0 : i32
    %c0_i32_1 = arith.constant 0 : i32
    return %c0_i32, %c0_i32_0 : i32, i32
  }
  func.func @transform_2(%arg0: i32) -> (i32, i32) {
    %c0_i32 = arith.constant 0 : i32
    %c0_i32_0 = arith.constant 0 : i32
    %c0_i32_1 = arith.constant 0 : i32
    return %c0_i32, %c0_i32_0 : i32, i32
  }
  func.func @transform_3(%arg0: i32) -> (i32, i32) {
    %c0_i32 = arith.constant 0 : i32
    %c0_i32_0 = arith.constant 0 : i32
    %c0_i32_1 = arith.constant 0 : i32
    return %c0_i32, %c0_i32_0 : i32, i32
  }
  func.func @transform_4(%arg0: i32) -> (i32, i32) {
    %c0_i32 = arith.constant 0 : i32
    %c0_i32_0 = arith.constant 0 : i32
    return %arg0, %c0_i32 : i32, i32
  }
}

</mosaic_0001>

<llo_original>
// kernel: tpu_custom_call.1
$region0: #{tpu_custom_call.1}
  #allocation0 [shape = 'u32[]', space=smem, size = 0x4, offset = 0x4, fixed_abs, tag = 'smem constant byte address 0x4 - core index']
  #allocation1 [shape = 'u32[144,128]{1,0:T(1,128)}', space=vmem, size = 0x12000, scoped, tag = 'internal scratch']
  #allocation2 [shape = 'f32[1,1]{1,0:T(1,128)S(6)}', space=smem, size = 0x200, scoped, tag = 'scoped memory for tpu_custom_call.1']
  %s0 = inlined_call_operand.hbm [shape: f32[16,32], index: 0, kind: input, shape index: {}]
  %s1 = inlined_call_operand.hbm [shape: bf16[32,128], index: 1, kind: input, shape index: {}]
  %s2 = inlined_call_operand.vmem [shape: f32[1,128], index: 2, kind: input, shape index: {}]
  %s3 = inlined_call_operand.<no memory space> [shape: f32[1,1], index: 3, kind: input, shape index: {}]
  %s4 = inlined_call_operand.hbm [shape: f32[16,128], index: 4, kind: output, shape index: {}]
  %s5 = sld [smem:[#allocation0]]
  $region34: #{tpu_custom_call.1} parent=0
    _
  %s7 = ssub.s32 1, %s5
  %s8 = scalar_select 0, %s7, %s5
  %9 = sst [smem:[#allocation2]] %s3
  $region1: #{tpu_custom_call.1} parent=0
    #allocation3 [shape = 'u8[8192]{0}', space=vmem, size = 0x2000, scoped, tag = 'input window, operand 0, single buffered']
    #allocation4 [shape = 's32[1]{0}', space=sflag, size = 0x4, scoped, tag = 'scoped memory for tpu_custom_call.1']
    #allocation5 [shape = 's32[1]{0}', space=sflag, size = 0x4, scoped, tag = 'scoped memory for tpu_custom_call.1']
    #allocation6 [shape = 'u8[8192]{0}', space=vmem, size = 0x2000, scoped, tag = 'input window, operand 1, single buffered']
    #allocation7 [shape = 's32[1]{0}', space=sflag, size = 0x4, scoped, tag = 'scoped memory for tpu_custom_call.1']
    #allocation8 [shape = 'u8[8192]{0}', space=vmem, size = 0x2000, scoped, tag = 'output window, operand 0, single buffered']
    %10 = vsyncpa [#allocation4], 0
    %11 = vsyncpa [#allocation7], 0
    %12 = vsyncpa [#allocation5], 0
    // Predicated region
    $region2: #{tpu_custom_call.1} parent=1 // pred_check
      _
    $region3: #{tpu_custom_call.1} parent=1 // pred_check_branch
      %14 = sbr.rel (0) target = $region5
    $region4: #{tpu_custom_call.1} parent=1 // pred_region
      %s16 = ssub.s32 256, 256
      %17 = vsyncadd [#allocation4], %s16
      %s18 = sshll.u32 [#allocation3], 4
      %s19 = int_to_ptr.vmem [resolvable:$true] %s18
      %24 = dma.hbm_to_vmem [thread:$0]  %s0, 256, %s19, [#allocation4], 128, 128, 8
    $region5: #{tpu_custom_call.1} parent=1 // pred_fallthru
      _
    // Predicated region
    $region6: #{tpu_custom_call.1} parent=1 // pred_check
      _
    $region7: #{tpu_custom_call.1} parent=1 // pred_check_branch
      %26 = sbr.rel (0) target = $region9
    $region8: #{tpu_custom_call.1} parent=1 // pred_region
      %s28 = ssub.s32 256, 256
      %29 = vsyncadd [#allocation7], %s28
      %s30 = sshll.u32 [#allocation6], 4
      %s31 = int_to_ptr.vmem [resolvable:$true] %s30
      %36 = dma.hbm_to_vmem [thread:$0]  %s1, 256, %s31, [#allocation7], 64, 64, 4
    $region9: #{tpu_custom_call.1} parent=1 // pred_fallthru
      _
    // Predicated region
    $region10: #{tpu_custom_call.1} parent=1 // pred_check
      _
    $region11: #{tpu_custom_call.1} parent=1 // pred_check_branch
      %38 = sbr.rel (0) target = $region13
    $region12: #{tpu_custom_call.1} parent=1 // pred_region
      _
    $region13: #{tpu_custom_call.1} parent=1 // pred_fallthru
      _
    // Predicated region
    $region14: #{tpu_custom_call.1} parent=1 // pred_check
      _
    $region15: #{tpu_custom_call.1} parent=1 // pred_check_branch
      %40 = sbr.rel (0) target = $region17
    $region16: #{tpu_custom_call.1} parent=1 // pred_region
      _
    $region17: #{tpu_custom_call.1} parent=1 // pred_fallthru
      _
    // Predicated region
    $region18: #{tpu_custom_call.1} parent=1 // pred_check
      _
    $region19: #{tpu_custom_call.1} parent=1 // pred_check_branch
      %42 = sbr.rel (0) target = $region21
    $region20: #{tpu_custom_call.1} parent=1 // pred_region
      %43 = dma.done [#allocation4], 256
    $region21: #{tpu_custom_call.1} parent=1 // pred_fallthru
      _
    // Predicated region
    $region22: #{tpu_custom_call.1} parent=1 // pred_check
      _
    $region23: #{tpu_custom_call.1} parent=1 // pred_check_branch
      %45 = sbr.rel (0) target = $region25
    $region24: #{tpu_custom_call.1} parent=1 // pred_region
      %46 = dma.done [#allocation7], 256
    $region25: #{tpu_custom_call.1} parent=1 // pred_fallthru
      _
    %v48 = vld [vmem:[#allocation3] sm:$0xff]
    %v49 = vld [vmem:[#allocation3 + $0x8] sm:$0xff]
    %v50 = vpack.c.bf16 %v49, %v48
    %v51 = vld [vmem:[#allocation6] sm:$0xf]
    %v52 = vld [vmem:[#allocation6 + $0x4] sm:$0xf]
    %v53 = vld [vmem:[#allocation6 + $0x8] sm:$0xf]
    %v54 = vld [vmem:[#allocation6 + $0xc] sm:$0xf]
    %v55 = vld [vmem:[%s2] sm:$0x1]
    %v57 = vlaneseq
    %v58 = vshrl.u32 %v57, 7
    %v59 = vsub.s32 0, %v58
    %v60 = vrot.slane %v55, %v59
    %v66 = vunpack.c.l.b16 %v51
    %v67 = vunpack.c.l.b16 %v52
    %v68 = vunpack.c.l.b16 %v53
    %v69 = vunpack.c.l.b16 %v54
    %v70 = vpack.c.b16 %v67, %v66
    %v71 = vpack.c.b16 %v69, %v68
    %vm74 = vcmask 261120
    %v76 = vsel %vm74, %v50, 0
    %78 = vmatprep.subr.bf16.mxu0 0
    %79 = vmatpush1.bf16.msra.mxu0 %v70
    %80 = vmatprep.subr.bf16.mxu0 0
    %81 = vmatpush1.bf16.msra.mxu0 %v71
    %82 = vmatprep.subr.bf16.mxu0 0
    %83 = vmatpush1.bf16.msra.mxu0 0
    %84 = vmatprep.subr.bf16.mxu0 0
    %85 = vmatpush1.bf16.msra.mxu0 0
    %86 = vmatprep.subr.bf16.mxu0 0
    %87 = vmatpush1.bf16.msra.mxu0 0
    %88 = vmatprep.subr.bf16.mxu0 0
    %89 = vmatpush1.bf16.msra.mxu0 0
    %90 = vmatprep.subr.bf16.mxu0 0
    %91 = vmatpush1.bf16.msra.mxu0 0
    %92 = vmatprep.subr.bf16.mxu0 0
    %93 = vmatpush1.bf16.msra.mxu0 0
    %94 = vmatprep.subr.bf16.mxu0 0
    %95 = vmatpush1.bf16.msra.mxu0 0
    %96 = vmatprep.subr.bf16.mxu0 0
    %97 = vmatpush1.bf16.msra.mxu0 0
    %98 = vmatprep.subr.bf16.mxu0 0
    %99 = vmatpush1.bf16.msra.mxu0 0
    %100 = vmatprep.subr.bf16.mxu0 0
    %101 = vmatpush1.bf16.msra.mxu0 0
    %102 = vmatprep.subr.bf16.mxu0 0
    %103 = vmatpush1.bf16.msra.mxu0 0
    %104 = vmatprep.subr.bf16.mxu0 0
    %105 = vmatpush1.bf16.msra.mxu0 0
    %106 = vmatprep.subr.bf16.mxu0 0
    %107 = vmatpush1.bf16.msra.mxu0 0
    %108 = vmatprep.subr.bf16.mxu0 0
    %109 = vmatpush1.bf16.msra.mxu0 0
    %110 = vmatprep.mubr.bf16.mxu0 0
    %111 = vmatmul.mubr.bf16.gmra.mrb[0].mxu0 %v76
    %v112 = vpop.f32.mrb[0].mxu0
    %v113 = vadd.f32 %v60, %v112
    %v114 = vpop.f32.mrb[0].mxu0
    %v115 = vpop.f32.mrb[0].mxu0
    %v116 = vadd.f32 %v60, %v115
    %v117 = vpop.f32.mrb[0].mxu0
    %118 = vdwg.mxu0
    %s119 = sld [smem:[#allocation2]]
    %vm120 = vcmp.ge.f32.partialorder %v113, 0.0
    %vm121 = vcmp.ge.f32.partialorder %v116, 0.0
    %v122 = vstv %s119
    %v123 = vmul.f32 %v122, %v113
    %v124 = vmul.f32 %v122, %v116
    %v125 = vsel %vm120, %v113, %v123
    %v126 = vsel %vm121, %v116, %v124
    %127 = vst [vmem:[#allocation8] sm:$0xff] %v125
    %128 = vst [vmem:[#allocation8 + $0x8] sm:$0xff] %v126
    // Predicated region
    $region26: #{tpu_custom_call.1} parent=1 // pred_check
      _
    $region27: #{tpu_custom_call.1} parent=1 // pred_check_branch
      %130 = sbr.rel (0) target = $region29
    $region28: #{tpu_custom_call.1} parent=1 // pred_region
      %s132 = ssub.s32 256, 256
      %133 = vsyncadd [#allocation5], %s132
      %s134 = sshll.u32 [#allocation8], 4
      %s135 = int_to_ptr.vmem [resolvable:$true] %s134
      %140 = dma.vmem_to_hbm [thread:$0]  %s135, 256, %s4, [#allocation5], 128, 128, 8
    $region29: #{tpu_custom_call.1} parent=1 // pred_fallthru
      _
    // Predicated region
    $region30: #{tpu_custom_call.1} parent=1 // pred_check
      _
    $region31: #{tpu_custom_call.1} parent=1 // pred_check_branch
      %142 = sbr.rel (0) target = $region33
    $region32: #{tpu_custom_call.1} parent=1 // pred_region
      %143 = dma.done [#allocation5], 256
    $region33: #{tpu_custom_call.1} parent=1 // pred_fallthru
      _
    %144 = vsyncpa [#allocation4], 1
    %145 = vsyncpa [#allocation7], 1
    %146 = vsyncpa [#allocation5], 1

</llo_original>
